<compile_context>
chip_gen: v7x
topology: tpu7x:2x2x1
jax: 0.10.0
libtpu: 0.0.40
codegen_flags: <defaults>
</compile_context>

<pallas_src>
import jax
import jax.numpy as jnp
from jax.experimental import pallas as pl
from jax.experimental.pallas import tpu as pltpu

_MIB = 1024 * 1024


def _round_up(n: int, m: int) -> int:
    return ((n + m - 1) // m) * m


def _round_down(n: int, m: int) -> int:
    return (n // m) * m


def _vmem_capacity_bytes() -> int:
    """Physical per-core VMEM (v5e/v6e 128 MiB, v7x 64 MiB); conservative fallback."""
    try:
        info = pltpu.get_tpu_info()
        cap = int(getattr(info, "vmem_capacity_bytes", 0) or 0)
        if cap > 0:
            return cap
    except Exception:
        pass
    return 64 * _MIB


def _resident_spec(block_shape):
    """BlockSpec for an operand fetched once and held resident (single buffer)."""
    index_map = lambda i, _nd=len(block_shape): (0,) * _nd
    try:
        return pl.BlockSpec(block_shape, index_map, pipeline_mode=pl.Buffered(1))
    except Exception:  # older jax without pipeline_mode: fall back to default buffering
        return pl.BlockSpec(block_shape, index_map)


def _select_tile_rows(B, img_dim, hidden, x_itemsize, vmem_limit_bytes):
    """Pick the batch-tile row count for the 1-D 'parallel' grid."""
    sub = max(8, 32 // x_itemsize)  # packed-sublane multiple: 8 f32 / 16 bf16 / 32 int8,fp8

    # Resident (single-buffered) W1 + f32 biases/row-weight.
    weight_bytes = img_dim * hidden * x_itemsize + (2 * hidden + 1) * 4
    # Per-row VMEM: double-buffered x row + f32 hidden activation + small temps/output.
    per_row = 2 * img_dim * x_itemsize + hidden * 4 + 32
    usable = int(0.75 * vmem_limit_bytes) - weight_bytes  # 25% headroom for compiler scratch
    cap = usable // per_row if usable > 0 else 0
    if cap < sub:
        # TODO(synk): for img_dim so large that even a `sub`-row tile overflows VMEM,
        # add a K grid axis with an f32 VMEM accumulator (init/finalize via pl.when).
        cap = sub
    elif cap >= 256:
        cap = _round_down(cap, 256)  # MXU-friendly M
    else:
        cap = _round_down(cap, sub)

    # Keep >=4 grid steps at large B so both v7x TensorCores get work and the
    # x DMA stays pipelined with compute. Harmless on single-TC v5e/v6e.
    parallel_cap = max(sub, _round_up(pl.cdiv(B, 4), 256))

    tb = min(cap, parallel_cap, _round_up(B, sub))
    return max(sub, tb)


def discriminator_kernel(x_ref, w1_ref, b1_ref, w2_ref, b2_ref, o_ref):
    """One batch tile: sigmoid(leaky_relu(x @ W1 + b1, 0.1) @ W2.T + b2)."""
    # ---- Linear 1 on the MXU (x-dtype operands, f32 accumulate) -------------
    h = jnp.dot(x_ref[...], w1_ref[...], preferred_element_type=jnp.float32)
    h = h + b1_ref[...]                                     # (tb, 128) + (1, 128)

    # ---- LeakyReLU(0.1) on the VPU -------------------------------------------
    h = jnp.where(h > 0, h, 0.1 * h)

    # ---- Linear 2 (128 -> 1): VPU multiply + XLU cross-lane reduce ----------
    # (an N=1 MXU matmul would light up <1% of the array and still pay push/pop)
    z = jnp.sum(h * w2_ref[...], axis=-1, keepdims=True) + b2_ref[...]   # (tb, 1)

    # ---- Numerically stable sigmoid (EUP exp, argument always <= 0) ---------
    e = jnp.exp(-jnp.abs(z))
    r = pl.reciprocal(1.0 + e)
    o_ref[...] = jnp.where(z >= 0, r, e * r).astype(o_ref.dtype)


def discriminator_forward(x, w1, b1, w2, b2, *, tb=None, out_dtype=jnp.float32):
    """Fused GAN-discriminator forward.

    x  : (B, img_dim)              f32 or bf16
    w1 : (img_dim, hidden)         (= torch weight.T)
    b1 : (hidden,) or (1, hidden)
    w2 : (hidden,) or (1, hidden)  (= torch weight of nn.Linear(hidden, 1))
    b2 : scalar / (1,) / (1, 1)
    """
    B, img_dim = x.shape
    hidden = w1.shape[1]

    # Matmul operands follow x's dtype (bf16 -> native MXU path, halves the
    # dominant x HBM stream). All post-matmul math stays f32 (v5e: no bf16 VPU/EUP).
    # TODO(synk): optional int8 (v5e/v6e) / fp8 (v7x) x & W1 path for ~4x on the
    # HBM-bound stream; needs numerics validation against the GAN training loop.
    w1 = w1.astype(x.dtype)
    b1 = jnp.asarray(b1, jnp.float32).reshape(1, hidden)
    w2 = jnp.asarray(w2, jnp.float32).reshape(1, hidden)
    b2 = jnp.asarray(b2, jnp.float32).reshape(1, 1)

    itemsize = jnp.dtype(x.dtype).itemsize
    sub = max(8, 32 // itemsize)

    # Generation-aware scoped-VMEM budget: half of physical VMEM, capped at 64 MiB.
    #   v5e/v6e: 128 MiB physical -> 64 MiB limit;  v7x: 64 MiB physical -> 32 MiB.
    vmem_limit = max(32 * _MIB, min(_vmem_capacity_bytes() // 2, 64 * _MIB))

    if tb is None:
        tb = _select_tile_rows(B, img_dim, hidden, itemsize, vmem_limit)
    else:
        tb = max(sub, min(_round_up(tb, sub), _round_up(B, sub)))

    grid = (pl.cdiv(B, tb),)   # partial last tile handled by Pallas edge masking

    return pl.pallas_call(
        discriminator_kernel,
        out_shape=jax.ShapeDtypeStruct((B, 1), out_dtype),
        grid_spec=pltpu.PrefetchScalarGridSpec(
            num_scalar_prefetch=0,
            grid=grid,
            in_specs=[
                pl.BlockSpec((tb, img_dim), lambda i: (i, 0)),   # x tile (streamed)
                _resident_spec((img_dim, hidden)),               # W1 (resident, 1 buffer)
                _resident_spec((1, hidden)),                     # b1
                _resident_spec((1, hidden)),                     # w2 row
                _resident_spec((1, 1)),                          # b2
            ],
            out_specs=pl.BlockSpec((tb, 1), lambda i: (i, 0)),
        ),
        compiler_params=pltpu.CompilerParams(
            dimension_semantics=("parallel",),      # batch tiles are independent
            vmem_limit_bytes=int(vmem_limit),
        ),
    )(x, w1, b1, w2, b2)


def make_params(key, img_dim, hidden=128, dtype=jnp.float32):
    """PyTorch-Linear-style init: uniform(-1/sqrt(fan_in), 1/sqrt(fan_in))."""
    k1, k2, k3, k4 = jax.random.split(key, 4)
    bound1 = 1.0 / (img_dim ** 0.5)
    bound2 = 1.0 / (hidden ** 0.5)
    w1 = jax.random.uniform(k1, (img_dim, hidden), dtype, -bound1, bound1)  # weight.T
    b1 = jax.random.uniform(k2, (1, hidden), dtype, -bound1, bound1)
    w2 = jax.random.uniform(k3, (1, hidden), dtype, -bound2, bound2)        # weight (row)
    b2 = jax.random.uniform(k4, (1, 1), dtype, -bound2, bound2)
    return w1, b1, w2, b2


def reference_forward(x, w1, b1, w2, b2):
    h = x.astype(jnp.float32) @ w1.astype(jnp.float32) + b1
    h = jnp.where(h > 0, h, 0.1 * h)
    z = h @ w2.T + b2
    return jax.nn.sigmoid(z)


if __name__ == "__main__":
    # MNIST-style discriminator (img_dim = 28*28 = 784), small batch.
    B, IMG_DIM = 64, 784
    key = jax.random.PRNGKey(0)
    kx, kp = jax.random.split(key)

    x = jax.random.normal(kx, (B, IMG_DIM), dtype=jnp.float32)
    w1, b1, w2, b2 = make_params(kp, IMG_DIM)

    # Auto tile selection (single-step grid at this small B).
    out = jax.block_until_ready(discriminator_forward(x, w1, b1, w2, b2))
    ref = reference_forward(x, w1, b1, w2, b2)
    assert out.shape == (B, 1), out.shape
    assert jnp.allclose(out, ref, atol=1e-4, rtol=1e-4), \
        float(jnp.max(jnp.abs(out - ref)))

    # Multi-step grid with a partial final tile (pipelining + edge masking).
    x_odd = x[:50]
    out_odd = jax.block_until_ready(
        discriminator_forward(x_odd, w1, b1, w2, b2, tb=16))
    ref_odd = reference_forward(x_odd, w1, b1, w2, b2)
    assert out_odd.shape == (50, 1), out_odd.shape
    assert jnp.allclose(out_odd, ref_odd, atol=1e-4, rtol=1e-4), \
        float(jnp.max(jnp.abs(out_odd - ref_odd)))

    print("KERNEL_OK")
</pallas_src>

<mosaic_0001>
module attributes {stable_mosaic.version = 11 : i64} {
  func.func @discriminator_kernel(%arg0: i32, %arg1: memref<64x784xf32, #tpu.memory_space<vmem>>, %arg2: memref<784x128xf32, #tpu.memory_space<vmem>>, %arg3: memref<1x128xf32, #tpu.memory_space<vmem>>, %arg4: memref<1x128xf32, #tpu.memory_space<vmem>>, %arg5: memref<1x1xf32, #tpu.memory_space<vmem>>, %arg6: memref<64x1xf32, #tpu.memory_space<vmem>>) attributes {dimension_semantics = [#tpu.dimension_semantics<parallel>], iteration_bounds = array<i64: 1>, scalar_prefetch = 0 : i64, scratch_operands = 0 : i64, tpu.core_type = #tpu.core_type<tc>, window_params = [{transform_indices = @transform_0, window_bounds = array<i64: 64, 784>}, {pipeline_mode = #tpu.pipeline_mode<synchronous>, transform_indices = @transform_1, window_bounds = array<i64: 784, 128>}, {pipeline_mode = #tpu.pipeline_mode<synchronous>, transform_indices = @transform_2, window_bounds = array<i64: 1, 128>}, {pipeline_mode = #tpu.pipeline_mode<synchronous>, transform_indices = @transform_3, window_bounds = array<i64: 1, 128>}, {pipeline_mode = #tpu.pipeline_mode<synchronous>, transform_indices = @transform_4, window_bounds = array<i64: 1, 1>}, {transform_indices = @transform_5, window_bounds = array<i64: 64, 1>}]} {
    %c0 = arith.constant 0 : index
    %c0_0 = arith.constant 0 : index
    %0 = vector.load %arg1[%c0, %c0_0] : memref<64x784xf32, #tpu.memory_space<vmem>>, vector<64x784xf32>
    %c0_1 = arith.constant 0 : index
    %c0_2 = arith.constant 0 : index
    %1 = vector.load %arg2[%c0_1, %c0_2] : memref<784x128xf32, #tpu.memory_space<vmem>>, vector<784x128xf32>
    %cst = arith.constant dense<0.000000e+00> : vector<64x128xf32>
    %2 = tpu.matmul %0, %1, %cst {dimension_numbers = #tpu.dot_dimension_numbers<[1], [0], [0], [1], [0, 0, 1, 1], [], []>} : vector<64x784xf32>, vector<784x128xf32>, vector<64x128xf32> -> vector<64x128xf32>
    %c0_3 = arith.constant 0 : index
    %c0_4 = arith.constant 0 : index
    %3 = vector.load %arg3[%c0_3, %c0_4] : memref<1x128xf32, #tpu.memory_space<vmem>>, vector<1x128xf32>
    %4 = vector.broadcast %3 : vector<1x128xf32> to vector<64x128xf32>
    %5 = arith.addf %2, %4 : vector<64x128xf32>
    %cst_5 = arith.constant 0.000000e+00 : f32
    %6 = vector.broadcast %cst_5 : f32 to vector<64x128xf32>
    %7 = arith.cmpf ogt, %5, %6 : vector<64x128xf32>
    %cst_6 = arith.constant 1.000000e-01 : f32
    %8 = vector.broadcast %cst_6 : f32 to vector<64x128xf32>
    %9 = arith.mulf %8, %5 : vector<64x128xf32>
    %10 = arith.select %7, %5, %9 : vector<64x128xi1>, vector<64x128xf32>
    %c0_7 = arith.constant 0 : index
    %c0_8 = arith.constant 0 : index
    %11 = vector.load %arg4[%c0_7, %c0_8] : memref<1x128xf32, #tpu.memory_space<vmem>>, vector<1x128xf32>
    %12 = vector.broadcast %11 : vector<1x128xf32> to vector<64x128xf32>
    %13 = arith.mulf %10, %12 : vector<64x128xf32>
    %cst_9 = arith.constant dense<0.000000e+00> : vector<64xf32>
    %14 = vector.multi_reduction <add>, %13, %cst_9 [1] : vector<64x128xf32> to vector<64xf32>
    %15 = vector.shape_cast %14 : vector<64xf32> to vector<64x1xf32>
    %c0_10 = arith.constant 0 : index
    %c0_11 = arith.constant 0 : index
    %16 = vector.load %arg5[%c0_10, %c0_11] : memref<1x1xf32, #tpu.memory_space<vmem>>, vector<1x1xf32>
    %17 = vector.broadcast %16 : vector<1x1xf32> to vector<64x1xf32>
    %18 = arith.addf %15, %17 : vector<64x1xf32>
    %19 = math.absf %18 : vector<64x1xf32>
    %cst_12 = arith.constant 0.000000e+00 : f32
    %20 = vector.broadcast %cst_12 : f32 to vector<64x1xf32>
    %21 = arith.subf %20, %19 : vector<64x1xf32>
    %22 = math.exp %21 : vector<64x1xf32>
    %cst_13 = arith.constant 1.000000e+00 : f32
    %23 = vector.broadcast %cst_13 : f32 to vector<64x1xf32>
    %24 = arith.addf %23, %22 : vector<64x1xf32>
    %25 = tpu.reciprocal %24 : vector<64x1xf32> -> vector<64x1xf32>
    %cst_14 = arith.constant 0.000000e+00 : f32
    %26 = vector.broadcast %cst_14 : f32 to vector<64x1xf32>
    %27 = arith.cmpf oge, %18, %26 : vector<64x1xf32>
    %28 = arith.mulf %22, %25 : vector<64x1xf32>
    %29 = arith.select %27, %25, %28 : vector<64x1xi1>, vector<64x1xf32>
    %c0_15 = arith.constant 0 : index
    %c0_16 = arith.constant 0 : index
    %30 = vector.load %arg6[%c0_15, %c0_16] : memref<64x1xf32, #tpu.memory_space<vmem>>, vector<64x1xf32>
    tpu.vector_store %arg6[%c0_15, %c0_16], %29 {strides = array<i32>} : memref<64x1xf32, #tpu.memory_space<vmem>>, vector<64x1xf32>,
    return
  }
  func.func @transform_0(%arg0: i32) -> (i32, i32) {
    %c0_i32 = arith.constant 0 : i32
    %c0_i32_0 = arith.constant 0 : i32
    return %arg0, %c0_i32 : i32, i32
  }
  func.func @transform_1(%arg0: i32) -> (i32, i32) {
    %c0_i32 = arith.constant 0 : i32
    %c0_i32_0 = arith.constant 0 : i32
    %c0_i32_1 = arith.constant 0 : i32
    return %c0_i32, %c0_i32_0 : i32, i32
  }
  func.func @transform_2(%arg0: i32) -> (i32, i32) {
    %c0_i32 = arith.constant 0 : i32
    %c0_i32_0 = arith.constant 0 : i32
    %c0_i32_1 = arith.constant 0 : i32
    return %c0_i32, %c0_i32_0 : i32, i32
  }
  func.func @transform_3(%arg0: i32) -> (i32, i32) {
    %c0_i32 = arith.constant 0 : i32
    %c0_i32_0 = arith.constant 0 : i32
    %c0_i32_1 = arith.constant 0 : i32
    return %c0_i32, %c0_i32_0 : i32, i32
  }
  func.func @transform_4(%arg0: i32) -> (i32, i32) {
    %c0_i32 = arith.constant 0 : i32
    %c0_i32_0 = arith.constant 0 : i32
    %c0_i32_1 = arith.constant 0 : i32
    return %c0_i32, %c0_i32_0 : i32, i32
  }
  func.func @transform_5(%arg0: i32) -> (i32, i32) {
    %c0_i32 = arith.constant 0 : i32
    %c0_i32_0 = arith.constant 0 : i32
    return %arg0, %c0_i32 : i32, i32
  }
}

</mosaic_0001>

<llo_original>
// kernel: tpu_custom_call.1
$region0: #{tpu_custom_call.1}
  #allocation0 [shape = 'u32[]', space=smem, size = 0x4, offset = 0x4, fixed_abs, tag = 'smem constant byte address 0x4 - core index']
  #allocation1 [shape = 'u32[144,128]{1,0:T(1,128)}', space=vmem, size = 0x12000, scoped, tag = 'internal scratch']
  #allocation2 [shape = 'f32[1,1]{1,0:T(1,128)S(1)}', space=vmem, size = 0x200, scoped, tag = 'scoped memory for tpu_custom_call.1']
  %s0 = inlined_call_operand.hbm [shape: f32[64,784], index: 0, kind: input, shape index: {}]
  %s1 = inlined_call_operand.hbm [shape: f32[784,128], index: 1, kind: input, shape index: {}]
  %s2 = inlined_call_operand.vmem [shape: f32[1,128], index: 2, kind: input, shape index: {}]
  %s3 = inlined_call_operand.vmem [shape: f32[1,128], index: 3, kind: input, shape index: {}]
  %s4 = inlined_call_operand.<no memory space> [shape: f32[1,1], index: 4, kind: input, shape index: {}]
  %s5 = inlined_call_operand.vmem [shape: f32[64,1], index: 5, kind: output, shape index: {}]
  %s6 = sld [smem:[#allocation0]]
  $region38: #{tpu_custom_call.1} parent=0
    _
  %s8 = ssub.s32 1, %s6
  %s9 = scalar_select 0, %s8, %s6
  %v10 = vstv %s4
  %11 = vst [vmem:[#allocation2] sm:$0x1] %v10
  $region1: #{tpu_custom_call.1} parent=0
    #allocation3 [shape = 'u8[229376]{0}', space=vmem, size = 0x38000, scoped, tag = 'input window, operand 0, single buffered']
    #allocation4 [shape = 's32[1]{0}', space=sflag, size = 0x4, scoped, tag = 'scoped memory for tpu_custom_call.1']
    #allocation5 [shape = 'u8[401408]{0}', space=vmem, size = 0x62000, scoped, tag = 'input window, operand 1, single buffered']
    #allocation6 [shape = 's32[1]{0}', space=sflag, size = 0x4, scoped, tag = 'scoped memory for tpu_custom_call.1']
    %12 = vsyncpa [#allocation4], 0
    %13 = vsyncpa [#allocation6], 0
    // Predicated region
    $region2: #{tpu_custom_call.1} parent=1 // pred_check
      _
    $region3: #{tpu_custom_call.1} parent=1 // pred_check_branch
      %15 = sbr.rel (0) target = $region5
    $region4: #{tpu_custom_call.1} parent=1 // pred_region
      %s17 = ssub.s32 7168, 7168
      %18 = vsyncadd [#allocation4], %s17
      %s19 = sshll.u32 [#allocation3], 4
      %s20 = int_to_ptr.vmem [resolvable:$true] %s19
      %25 = dma.hbm_to_vmem [thread:$0]  %s0, 7168, %s20, [#allocation4], 896, 896, 56
    $region5: #{tpu_custom_call.1} parent=1 // pred_fallthru
      _
    // Predicated region
    $region6: #{tpu_custom_call.1} parent=1 // pred_check
      _
    $region7: #{tpu_custom_call.1} parent=1 // pred_check_branch
      %27 = sbr.rel (0) target = $region9
    $region8: #{tpu_custom_call.1} parent=1 // pred_region
      %s29 = ssub.s32 12544, 12544
      %30 = vsyncadd [#allocation6], %s29
      %s31 = sshll.u32 [#allocation5], 4
      %s32 = int_to_ptr.vmem [resolvable:$true] %s31
      %37 = dma.hbm_to_vmem [thread:$0]  %s1, 12544, %s32, [#allocation6], 128, 128, 8
    $region9: #{tpu_custom_call.1} parent=1 // pred_fallthru
      _
    // Predicated region
    $region10: #{tpu_custom_call.1} parent=1 // pred_check
      _
    $region11: #{tpu_custom_call.1} parent=1 // pred_check_branch
      %39 = sbr.rel (0) target = $region13
    $region12: #{tpu_custom_call.1} parent=1 // pred_region
      _
    $region13: #{tpu_custom_call.1} parent=1 // pred_fallthru
      _
    // Predicated region
    $region14: #{tpu_custom_call.1} parent=1 // pred_check
      _
    $region15: #{tpu_custom_call.1} parent=1 // pred_check_branch
      %41 = sbr.rel (0) target = $region17
    $region16: #{tpu_custom_call.1} parent=1 // pred_region
      _
    $region17: #{tpu_custom_call.1} parent=1 // pred_fallthru
      _
    // Predicated region
    $region18: #{tpu_custom_call.1} parent=1 // pred_check
      _
    $region19: #{tpu_custom_call.1} parent=1 // pred_check_branch
      %43 = sbr.rel (0) target = $region21
    $region20: #{tpu_custom_call.1} parent=1 // pred_region
      _
    $region21: #{tpu_custom_call.1} parent=1 // pred_fallthru
      _
    // Predicated region
    $region22: #{tpu_custom_call.1} parent=1 // pred_check
      _
    $region23: #{tpu_custom_call.1} parent=1 // pred_check_branch
      %45 = sbr.rel (0) target = $region25
    $region24: #{tpu_custom_call.1} parent=1 // pred_region
      %46 = dma.done [#allocation4], 7168
    $region25: #{tpu_custom_call.1} parent=1 // pred_fallthru
      _
    // Predicated region
    $region26: #{tpu_custom_call.1} parent=1 // pred_check
      _
    $region27: #{tpu_custom_call.1} parent=1 // pred_check_branch
      %48 = sbr.rel (0) target = $region29
    $region28: #{tpu_custom_call.1} parent=1 // pred_region
      %49 = dma.done [#allocation6], 12544
    $region29: #{tpu_custom_call.1} parent=1 // pred_fallthru
      _
    %v50 = vld [vmem:[#allocation3] sm:$0xff]
    %v51 = vld [vmem:[#allocation3 + $0x8] sm:$0xff]
    %v52 = vld [vmem:[#allocation3 + $0x10] sm:$0xff]
    %v53 = vld [vmem:[#allocation3 + $0x18] sm:$0xff]
    %v54 = vld [vmem:[#allocation3 + $0x20] sm:$0xff]
    %v55 = vld [vmem:[#allocation3 + $0x28] sm:$0xff]
    %v56 = vld [vmem:[#allocation3 + $0x30] sm:$0xff]
    %v57 = vld [vmem:[#allocation3 + $0x38] sm:$0xff]
    %v58 = vld [vmem:[#allocation3 + $0x40] sm:$0xff]
    %v59 = vld [vmem:[#allocation3 + $0x48] sm:$0xff]
    %v60 = vld [vmem:[#allocation3 + $0x50] sm:$0xff]
    %v61 = vld [vmem:[#allocation3 + $0x58] sm:$0xff]
    %v62 = vld [vmem:[#allocation3 + $0x60] sm:$0xff]
    %v63 = vld [vmem:[#allocation3 + $0x68] sm:$0xff]
    %v64 = vld [vmem:[#allocation3 + $0x70] sm:$0xff]
    %v65 = vld [vmem:[#allocation3 + $0x78] sm:$0xff]
    %v66 = vld [vmem:[#allocation3 + $0x80] sm:$0xff]
    %v67 = vld [vmem:[#allocation3 + $0x88] sm:$0xff]
    %v68 = vld [vmem:[#allocation3 + $0x90] sm:$0xff]
    %v69 = vld [vmem:[#allocation3 + $0x98] sm:$0xff]
    %v70 = vld [vmem:[#allocation3 + $0xa0] sm:$0xff]
    %v71 = vld [vmem:[#allocation3 + $0xa8] sm:$0xff]
    %v72 = vld [vmem:[#allocation3 + $0xb0] sm:$0xff]
    %v73 = vld [vmem:[#allocation3 + $0xb8] sm:$0xff]
    %v74 = vld [vmem:[#allocation3 + $0xc0] sm:$0xff]
    %v75 = vld [vmem:[#allocation3 + $0xc8] sm:$0xff]
    %v76 = vld [vmem:[#allocation3 + $0xd0] sm:$0xff]
    %v77 = vld [vmem:[#allocation3 + $0xd8] sm:$0xff]
    %v78 = vld [vmem:[#allocation3 + $0xe0] sm:$0xff]
    %v79 = vld [vmem:[#allocation3 + $0xe8] sm:$0xff]
    %v80 = vld [vmem:[#allocation3 + $0xf0] sm:$0xff]
    %v81 = vld [vmem:[#allocation3 + $0xf8] sm:$0xff]
    %v82 = vld [vmem:[#allocation3 + $0x100] sm:$0xff]
    %v83 = vld [vmem:[#allocation3 + $0x108] sm:$0xff]
    %v84 = vld [vmem:[#allocation3 + $0x110] sm:$0xff]
    %v85 = vld [vmem:[#allocation3 + $0x118] sm:$0xff]
    %v86 = vld [vmem:[#allocation3 + $0x120] sm:$0xff]
    %v87 = vld [vmem:[#allocation3 + $0x128] sm:$0xff]
    %v88 = vld [vmem:[#allocation3 + $0x130] sm:$0xff]
    %v89 = vld [vmem:[#allocation3 + $0x138] sm:$0xff]
    %v90 = vld [vmem:[#allocation3 + $0x140] sm:$0xff]
    %v91 = vld [vmem:[#allocation3 + $0x148] sm:$0xff]
    %v92 = vld [vmem:[#allocation3 + $0x150] sm:$0xff]
    %v93 = vld [vmem:[#allocation3 + $0x158] sm:$0xff]
    %v94 = vld [vmem:[#allocation3 + $0x160] sm:$0xff]
    %v95 = vld [vmem:[#allocation3 + $0x168] sm:$0xff]
    %v96 = vld [vmem:[#allocation3 + $0x170] sm:$0xff]
    %v97 = vld [vmem:[#allocation3 + $0x178] sm:$0xff]
    %v98 = vld [vmem:[#allocation3 + $0x180] sm:$0xff]
    %v99 = vld [vmem:[#allocation3 + $0x188] sm:$0xff]
    %v100 = vld [vmem:[#allocation3 + $0x190] sm:$0xff]
    %v101 = vld [vmem:[#allocation3 + $0x198] sm:$0xff]
    %v102 = vld [vmem:[#allocation3 + $0x1a0] sm:$0xff]
    %v103 = vld [vmem:[#allocation3 + $0x1a8] sm:$0xff]
    %v104 = vld [vmem:[#allocation3 + $0x1b0] sm:$0xff]
    %v105 = vld [vmem:[#allocation3 + $0x1b8] sm:$0xff]
    %v106 = vld [vmem:[#allocation5] sm:$0xff]
    %v107 = vld [vmem:[#allocation5 + $0x8] sm:$0xff]
    %v108 = vld [vmem:[#allocation5 + $0x10] sm:$0xff]
    %v109 = vld [vmem:[#allocation5 + $0x18] sm:$0xff]
    %v110 = vld [vmem:[#allocation5 + $0x20] sm:$0xff]
    %v111 = vld [vmem:[#allocation5 + $0x28] sm:$0xff]
    %v112 = vld [vmem:[#allocation5 + $0x30] sm:$0xff]
    %v113 = vld [vmem:[#allocation5 + $0x38] sm:$0xff]
    %v114 = vld [vmem:[#allocation5 + $0x40] sm:$0xff]
    %v115 = vld [vmem:[#allocation5 + $0x48] sm:$0xff]
    %v116 = vld [vmem:[#allocation5 + $0x50] sm:$0xff]
    %v117 = vld [vmem:[#allocation5 + $0x58] sm:$0xff]
    %v118 = vld [vmem:[#allocation5 + $0x60] sm:$0xff]
    %v119 = vld [vmem:[#allocation5 + $0x68] sm:$0xff]
    %v120 = vld [vmem:[#allocation5 + $0x70] sm:$0xff]
    %v121 = vld [vmem:[#allocation5 + $0x78] sm:$0xff]
    %v122 = vld [vmem:[#allocation5 + $0x80] sm:$0xff]
    %v123 = vld [vmem:[#allocation5 + $0x88] sm:$0xff]
    %v124 = vld [vmem:[#allocation5 + $0x90] sm:$0xff]
    %v125 = vld [vmem:[#allocation5 + $0x98] sm:$0xff]
    %v126 = vld [vmem:[#allocation5 + $0xa0] sm:$0xff]
    %v127 = vld [vmem:[#allocation5 + $0xa8] sm:$0xff]
    %v128 = vld [vmem:[#allocation5 + $0xb0] sm:$0xff]
    %v129 = vld [vmem:[#allocation5 + $0xb8] sm:$0xff]
    %v130 = vld [vmem:[#allocation5 + $0xc0] sm:$0xff]
    %v131 = vld [vmem:[#allocation5 + $0xc8] sm:$0xff]
    %v132 = vld [vmem:[#allocation5 + $0xd0] sm:$0xff]
    %v133 = vld [vmem:[#allocation5 + $0xd8] sm:$0xff]
    %v134 = vld [vmem:[#allocation5 + $0xe0] sm:$0xff]
    %v135 = vld [vmem:[#allocation5 + $0xe8] sm:$0xff]
    %v136 = vld [vmem:[#allocation5 + $0xf0] sm:$0xff]
    %v137 = vld [vmem:[#allocation5 + $0xf8] sm:$0xff]
    %v138 = vld [vmem:[#allocation5 + $0x100] sm:$0xff]
    %v139 = vld [vmem:[#allocation5 + $0x108] sm:$0xff]
    %v140 = vld [vmem:[#allocation5 + $0x110] sm:$0xff]
    %v141 = vld [vmem:[#allocation5 + $0x118] sm:$0xff]
    %v142 = vld [vmem:[#allocation5 + $0x120] sm:$0xff]
    %v143 = vld [vmem:[#allocation5 + $0x128] sm:$0xff]
    %v144 = vld [vmem:[#allocation5 + $0x130] sm:$0xff]
    %v145 = vld [vmem:[#allocation5 + $0x138] sm:$0xff]
    %v146 = vld [vmem:[#allocation5 + $0x140] sm:$0xff]
    %v147 = vld [vmem:[#allocation5 + $0x148] sm:$0xff]
    %v148 = vld [vmem:[#allocation5 + $0x150] sm:$0xff]
    %v149 = vld [vmem:[#allocation5 + $0x158] sm:$0xff]
    %v150 = vld [vmem:[#allocation5 + $0x160] sm:$0xff]
    %v151 = vld [vmem:[#allocation5 + $0x168] sm:$0xff]
    %v152 = vld [vmem:[#allocation5 + $0x170] sm:$0xff]
    %v153 = vld [vmem:[#allocation5 + $0x178] sm:$0xff]
    %v154 = vld [vmem:[#allocation5 + $0x180] sm:$0xff]
    %v155 = vld [vmem:[#allocation5 + $0x188] sm:$0xff]
    %v156 = vld [vmem:[#allocation5 + $0x190] sm:$0xff]
    %v157 = vld [vmem:[#allocation5 + $0x198] sm:$0xff]
    %v158 = vld [vmem:[#allocation5 + $0x1a0] sm:$0xff]
    %v159 = vld [vmem:[#allocation5 + $0x1a8] sm:$0xff]
    %v160 = vld [vmem:[#allocation5 + $0x1b0] sm:$0xff]
    %v161 = vld [vmem:[#allocation5 + $0x1b8] sm:$0xff]
    %v162 = vld [vmem:[#allocation5 + $0x1c0] sm:$0xff]
    %v163 = vld [vmem:[#allocation5 + $0x1c8] sm:$0xff]
    %v164 = vld [vmem:[#allocation5 + $0x1d0] sm:$0xff]
    %v165 = vld [vmem:[#allocation5 + $0x1d8] sm:$0xff]
    %v166 = vld [vmem:[#allocation5 + $0x1e0] sm:$0xff]
    %v167 = vld [vmem:[#allocation5 + $0x1e8] sm:$0xff]
    %v168 = vld [vmem:[#allocation5 + $0x1f0] sm:$0xff]
    %v169 = vld [vmem:[#allocation5 + $0x1f8] sm:$0xff]
    %v170 = vld [vmem:[#allocation5 + $0x200] sm:$0xff]
    %v171 = vld [vmem:[#allocation5 + $0x208] sm:$0xff]
    %v172 = vld [vmem:[#allocation5 + $0x210] sm:$0xff]
    %v173 = vld [vmem:[#allocation5 + $0x218] sm:$0xff]
    %v174 = vld [vmem:[#allocation5 + $0x220] sm:$0xff]
    %v175 = vld [vmem:[#allocation5 + $0x228] sm:$0xff]
    %v176 = vld [vmem:[#allocation5 + $0x230] sm:$0xff]
    %v177 = vld [vmem:[#allocation5 + $0x238] sm:$0xff]
    %v178 = vld [vmem:[#allocation5 + $0x240] sm:$0xff]
    %v179 = vld [vmem:[#allocation5 + $0x248] sm:$0xff]
    %v180 = vld [vmem:[#allocation5 + $0x250] sm:$0xff]
    %v181 = vld [vmem:[#allocation5 + $0x258] sm:$0xff]
    %v182 = vld [vmem:[#allocation5 + $0x260] sm:$0xff]
    %v183 = vld [vmem:[#allocation5 + $0x268] sm:$0xff]
    %v184 = vld [vmem:[#allocation5 + $0x270] sm:$0xff]
    %v185 = vld [vmem:[#allocation5 + $0x278] sm:$0xff]
    %v186 = vld [vmem:[#allocation5 + $0x280] sm:$0xff]
    %v187 = vld [vmem:[#allocation5 + $0x288] sm:$0xff]
    %v188 = vld [vmem:[#allocation5 + $0x290] sm:$0xff]
    %v189 = vld [vmem:[#allocation5 + $0x298] sm:$0xff]
    %v190 = vld [vmem:[#allocation5 + $0x2a0] sm:$0xff]
    %v191 = vld [vmem:[#allocation5 + $0x2a8] sm:$0xff]
    %v192 = vld [vmem:[#allocation5 + $0x2b0] sm:$0xff]
    %v193 = vld [vmem:[#allocation5 + $0x2b8] sm:$0xff]
    %v194 = vld [vmem:[#allocation5 + $0x2c0] sm:$0xff]
    %v195 = vld [vmem:[#allocation5 + $0x2c8] sm:$0xff]
    %v196 = vld [vmem:[#allocation5 + $0x2d0] sm:$0xff]
    %v197 = vld [vmem:[#allocation5 + $0x2d8] sm:$0xff]
    %v198 = vld [vmem:[#allocation5 + $0x2e0] sm:$0xff]
    %v199 = vld [vmem:[#allocation5 + $0x2e8] sm:$0xff]
    %v200 = vld [vmem:[#allocation5 + $0x2f0] sm:$0xff]
    %v201 = vld [vmem:[#allocation5 + $0x2f8] sm:$0xff]
    %v202 = vld [vmem:[#allocation5 + $0x300] sm:$0xff]
    %v203 = vld [vmem:[#allocation5 + $0x308] sm:$0xff]
    %v204 = vld [vmem:[%s2] sm:$0x1]
    %v206 = vlaneseq
    %v207 = vshrl.u32 %v206, 7
    %v208 = vsub.s32 0, %v207
    %v209 = vrot.slane %v204, %v208
    %vm211 = vcmask 130048
    %v213 = vsel %vm211, %v56, 0
    %v216 = vsel %vm211, %v63, 0
    %v219 = vsel %vm211, %v70, 0
    %v222 = vsel %vm211, %v77, 0
    %v225 = vsel %vm211, %v84, 0
    %v228 = vsel %vm211, %v91, 0
    %v231 = vsel %vm211, %v98, 0
    %v234 = vsel %vm211, %v105, 0
    %236 = vmatprep.subr.mxu0 0.0
    %237 = vmatpush1.msra.mxu0 %v106
    %238 = vmatprep.subr.mxu0 0.0
    %239 = vmatpush1.msra.mxu0 %v107
    %240 = vmatprep.subr.mxu0 0.0
    %241 = vmatpush1.msra.mxu0 %v108
    %242 = vmatprep.subr.mxu0 0.0
    %243 = vmatpush1.msra.mxu0 %v109
    %244 = vmatprep.subr.mxu0 0.0
    %245 = vmatpush1.msra.mxu0 %v110
    %246 = vmatprep.subr.mxu0 0.0
    %247 = vmatpush1.msra.mxu0 %v111
    %248 = vmatprep.subr.mxu0 0.0
    %249 = vmatpush1.msra.mxu0 %v112
    %250 = vmatprep.subr.mxu0 0.0
    %251 = vmatpush1.msra.mxu0 %v113
    %252 = vmatprep.subr.mxu0 0.0
    %253 = vmatpush1.msra.mxu0 %v114
    %254 = vmatprep.subr.mxu0 0.0
    %255 = vmatpush1.msra.mxu0 %v115
    %256 = vmatprep.subr.mxu0 0.0
    %257 = vmatpush1.msra.mxu0 %v116
    %258 = vmatprep.subr.mxu0 0.0
    %259 = vmatpush1.msra.mxu0 %v117
    %260 = vmatprep.subr.mxu0 0.0
    %261 = vmatpush1.msra.mxu0 %v118
    %262 = vmatprep.subr.mxu0 0.0
    %263 = vmatpush1.msra.mxu0 %v119
    %264 = vmatprep.subr.mxu0 0.0
    %265 = vmatpush1.msra.mxu0 %v120
    %266 = vmatprep.subr.mxu0 0.0
    %267 = vmatpush1.msra.mxu0 %v121
    %268 = vmatprep.subr.mxu0 0.0
    %269 = vmatpush1.msra.mxu0 %v122
    %270 = vmatprep.subr.mxu0 0.0
    %271 = vmatpush1.msra.mxu0 %v123
    %272 = vmatprep.subr.mxu0 0.0
    %273 = vmatpush1.msra.mxu0 %v124
    %274 = vmatprep.subr.mxu0 0.0
    %275 = vmatpush1.msra.mxu0 %v125
    %276 = vmatprep.subr.mxu0 0.0
    %277 = vmatpush1.msra.mxu0 %v126
    %278 = vmatprep.subr.mxu0 0.0
    %279 = vmatpush1.msra.mxu0 %v127
    %280 = vmatprep.subr.mxu0 0.0
    %281 = vmatpush1.msra.mxu0 %v128
    %282 = vmatprep.subr.mxu0 0.0
    %283 = vmatpush1.msra.mxu0 %v129
    %284 = vmatprep.subr.mxu0 0.0
    %285 = vmatpush1.msra.mxu0 %v130
    %286 = vmatprep.subr.mxu0 0.0
    %287 = vmatpush1.msra.mxu0 %v131
    %288 = vmatprep.subr.mxu0 0.0
    %289 = vmatpush1.msra.mxu0 %v132
    %290 = vmatprep.subr.mxu0 0.0
    %291 = vmatpush1.msra.mxu0 %v133
    %292 = vmatprep.subr.mxu0 0.0
    %293 = vmatpush1.msra.mxu0 %v134
    %294 = vmatprep.subr.mxu0 0.0
    %295 = vmatpush1.msra.mxu0 %v135
    %296 = vmatprep.subr.mxu0 0.0
    %297 = vmatpush1.msra.mxu0 %v136
    %298 = vmatprep.subr.mxu0 0.0
    %299 = vmatpush1.msra.mxu0 %v137
    %300 = vmatprep.mubr.f32.mxu0 %v51
    %301 = vmatmul.mubr.f32.gmra.mrb[0].mxu0 %v50
    %v302 = vpop.f32.mrb[0].mxu0
    %v303 = vadd.f32 %v209, %v302
    %v304 = vpop.f32.mrb[0].mxu0
    %305 = vmatprep.mubr.f32.mxu0 %v58
    %306 = vmatmul.mubr.f32.gmra.mrb[0].mxu0 %v57
    %v307 = vpop.f32.mrb[0].mxu0
    %v308 = vadd.f32 %v209, %v307
    %v309 = vpop.f32.mrb[0].mxu0
    %310 = vmatprep.mubr.f32.mxu0 %v65
    %311 = vmatmul.mubr.f32.gmra.mrb[0].mxu0 %v64
    %v312 = vpop.f32.mrb[0].mxu0
    %v313 = vadd.f32 %v209, %v312
    %v314 = vpop.f32.mrb[0].mxu0
    %315 = vmatprep.mubr.f32.mxu0 %v72
    %316 = vmatmul.mubr.f32.gmra.mrb[0].mxu0 %v71
    %v317 = vpop.f32.mrb[0].mxu0
    %v318 = vadd.f32 %v209, %v317
    %v319 = vpop.f32.mrb[0].mxu0
    %320 = vmatprep.mubr.f32.mxu0 %v79
    %321 = vmatmul.mubr.f32.gmra.mrb[0].mxu0 %v78
    %v322 = vpop.f32.mrb[0].mxu0
    %v323 = vadd.f32 %v209, %v322
    %v324 = vpop.f32.mrb[0].mxu0
    %325 = vmatprep.mubr.f32.mxu0 %v86
    %326 = vmatmul.mubr.f32.gmra.mrb[0].mxu0 %v85
    %v327 = vpop.f32.mrb[0].mxu0
    %v328 = vadd.f32 %v209, %v327
    %v329 = vpop.f32.mrb[0].mxu0
    %330 = vmatprep.mubr.f32.mxu0 %v93
    %331 = vmatmul.mubr.f32.gmra.mrb[0].mxu0 %v92
    %v332 = vpop.f32.mrb[0].mxu0
    %v333 = vadd.f32 %v209, %v332
    %v334 = vpop.f32.mrb[0].mxu0
    %335 = vmatprep.mubr.f32.mxu0 %v100
    %336 = vmatmul.mubr.f32.gmra.mrb[0].mxu0 %v99
    %v337 = vpop.f32.mrb[0].mxu0
    %v338 = vadd.f32 %v209, %v337
    %v339 = vpop.f32.mrb[0].mxu0
    %340 = vdwg.mxu0
    %341 = vmatprep.subr.mxu0 0.0
    %342 = vmatpush1.msra.mxu0 %v138
    %343 = vmatprep.subr.mxu0 0.0
    %344 = vmatpush1.msra.mxu0 %v139
    %345 = vmatprep.subr.mxu0 0.0
    %346 = vmatpush1.msra.mxu0 %v140
    %347 = vmatprep.subr.mxu0 0.0
    %348 = vmatpush1.msra.mxu0 %v141
    %349 = vmatprep.subr.mxu0 0.0
    %350 = vmatpush1.msra.mxu0 %v142
    %351 = vmatprep.subr.mxu0 0.0
    %352 = vmatpush1.msra.mxu0 %v143
    %353 = vmatprep.subr.mxu0 0.0
    %354 = vmatpush1.msra.mxu0 %v144
    %355 = vmatprep.subr.mxu0 0.0
    %356 = vmatpush1.msra.mxu0 %v145
    %357 = vmatprep.subr.mxu0 0.0
    %358 = vmatpush1.msra.mxu0 %v146
    %359 = vmatprep.subr.mxu0 0.0
    %360 = vmatpush1.msra.mxu0 %v147
    %361 = vmatprep.subr.mxu0 0.0
    %362 = vmatpush1.msra.mxu0 %v148
    %363 = vmatprep.subr.mxu0 0.0
    %364 = vmatpush1.msra.mxu0 %v149
    %365 = vmatprep.subr.mxu0 0.0
    %366 = vmatpush1.msra.mxu0 %v150
    %367 = vmatprep.subr.mxu0 0.0
    %368 = vmatpush1.msra.mxu0 %v151
    %369 = vmatprep.subr.mxu0 0.0
    %370 = vmatpush1.msra.mxu0 %v152
    %371 = vmatprep.subr.mxu0 0.0
    %372 = vmatpush1.msra.mxu0 %v153
    %373 = vmatprep.subr.mxu0 0.0
    %374 = vmatpush1.msra.mxu0 %v154
    %375 = vmatprep.subr.mxu0 0.0
    %376 = vmatpush1.msra.mxu0 %v155
    %377 = vmatprep.subr.mxu0 0.0
    %378 = vmatpush1.msra.mxu0 %v156
    %379 = vmatprep.subr.mxu0 0.0
    %380 = vmatpush1.msra.mxu0 %v157
    %381 = vmatprep.subr.mxu0 0.0
    %382 = vmatpush1.msra.mxu0 %v158
    %383 = vmatprep.subr.mxu0 0.0
    %384 = vmatpush1.msra.mxu0 %v159
    %385 = vmatprep.subr.mxu0 0.0
    %386 = vmatpush1.msra.mxu0 %v160
    %387 = vmatprep.subr.mxu0 0.0
    %388 = vmatpush1.msra.mxu0 %v161
    %389 = vmatprep.subr.mxu0 0.0
    %390 = vmatpush1.msra.mxu0 %v162
    %391 = vmatprep.subr.mxu0 0.0
    %392 = vmatpush1.msra.mxu0 %v163
    %393 = vmatprep.subr.mxu0 0.0
    %394 = vmatpush1.msra.mxu0 %v164
    %395 = vmatprep.subr.mxu0 0.0
    %396 = vmatpush1.msra.mxu0 %v165
    %397 = vmatprep.subr.mxu0 0.0
    %398 = vmatpush1.msra.mxu0 %v166
    %399 = vmatprep.subr.mxu0 0.0
    %400 = vmatpush1.msra.mxu0 %v167
    %401 = vmatprep.subr.mxu0 0.0
    %402 = vmatpush1.msra.mxu0 %v168
    %403 = vmatprep.subr.mxu0 0.0
    %404 = vmatpush1.msra.mxu0 %v169
    %405 = vmatprep.mubr.f32.mxu0 %v53
    %406 = vmatmul.mubr.f32.gmra.mrb[0].mxu0 %v52
    %v407 = vpop.f32.mrb[0].mxu0
    %v408 = vadd.f32 %v303, %v407
    %v409 = vpop.f32.mrb[0].mxu0
    %410 = vmatprep.mubr.f32.mxu0 %v60
    %411 = vmatmul.mubr.f32.gmra.mrb[0].mxu0 %v59
    %v412 = vpop.f32.mrb[0].mxu0
    %v413 = vadd.f32 %v308, %v412
    %v414 = vpop.f32.mrb[0].mxu0
    %415 = vmatprep.mubr.f32.mxu0 %v67
    %416 = vmatmul.mubr.f32.gmra.mrb[0].mxu0 %v66
    %v417 = vpop.f32.mrb[0].mxu0
    %v418 = vadd.f32 %v313, %v417
    %v419 = vpop.f32.mrb[0].mxu0
    %420 = vmatprep.mubr.f32.mxu0 %v74
    %421 = vmatmul.mubr.f32.gmra.mrb[0].mxu0 %v73
    %v422 = vpop.f32.mrb[0].mxu0
    %v423 = vadd.f32 %v318, %v422
    %v424 = vpop.f32.mrb[0].mxu0
    %425 = vmatprep.mubr.f32.mxu0 %v81
    %426 = vmatmul.mubr.f32.gmra.mrb[0].mxu0 %v80
    %v427 = vpop.f32.mrb[0].mxu0
    %v428 = vadd.f32 %v323, %v427
    %v429 = vpop.f32.mrb[0].mxu0
    %430 = vmatprep.mubr.f32.mxu0 %v88
    %431 = vmatmul.mubr.f32.gmra.mrb[0].mxu0 %v87
    %v432 = vpop.f32.mrb[0].mxu0
    %v433 = vadd.f32 %v328, %v432
    %v434 = vpop.f32.mrb[0].mxu0
    %435 = vmatprep.mubr.f32.mxu0 %v95
    %436 = vmatmul.mubr.f32.gmra.mrb[0].mxu0 %v94
    %v437 = vpop.f32.mrb[0].mxu0
    %v438 = vadd.f32 %v333, %v437
    %v439 = vpop.f32.mrb[0].mxu0
    %440 = vmatprep.mubr.f32.mxu0 %v102
    %441 = vmatmul.mubr.f32.gmra.mrb[0].mxu0 %v101
    %v442 = vpop.f32.mrb[0].mxu0
    %v443 = vadd.f32 %v338, %v442
    %v444 = vpop.f32.mrb[0].mxu0
    %445 = vdwg.mxu0
    %446 = vmatprep.subr.mxu0 0.0
    %447 = vmatpush1.msra.mxu0 %v170
    %448 = vmatprep.subr.mxu0 0.0
    %449 = vmatpush1.msra.mxu0 %v171
    %450 = vmatprep.subr.mxu0 0.0
    %451 = vmatpush1.msra.mxu0 %v172
    %452 = vmatprep.subr.mxu0 0.0
    %453 = vmatpush1.msra.mxu0 %v173
    %454 = vmatprep.subr.mxu0 0.0
    %455 = vmatpush1.msra.mxu0 %v174
    %456 = vmatprep.subr.mxu0 0.0
    %457 = vmatpush1.msra.mxu0 %v175
    %458 = vmatprep.subr.mxu0 0.0
    %459 = vmatpush1.msra.mxu0 %v176
    %460 = vmatprep.subr.mxu0 0.0
    %461 = vmatpush1.msra.mxu0 %v177
    %462 = vmatprep.subr.mxu0 0.0
    %463 = vmatpush1.msra.mxu0 %v178
    %464 = vmatprep.subr.mxu0 0.0
    %465 = vmatpush1.msra.mxu0 %v179
    %466 = vmatprep.subr.mxu0 0.0
    %467 = vmatpush1.msra.mxu0 %v180
    %468 = vmatprep.subr.mxu0 0.0
    %469 = vmatpush1.msra.mxu0 %v181
    %470 = vmatprep.subr.mxu0 0.0
    %471 = vmatpush1.msra.mxu0 %v182
    %472 = vmatprep.subr.mxu0 0.0
    %473 = vmatpush1.msra.mxu0 %v183
    %474 = vmatprep.subr.mxu0 0.0
    %475 = vmatpush1.msra.mxu0 %v184
    %476 = vmatprep.subr.mxu0 0.0
    %477 = vmatpush1.msra.mxu0 %v185
    %478 = vmatprep.subr.mxu0 0.0
    %479 = vmatpush1.msra.mxu0 %v186
    %480 = vmatprep.subr.mxu0 0.0
    %481 = vmatpush1.msra.mxu0 %v187
    %482 = vmatprep.subr.mxu0 0.0
    %483 = vmatpush1.msra.mxu0 %v188
    %484 = vmatprep.subr.mxu0 0.0
    %485 = vmatpush1.msra.mxu0 %v189
    %486 = vmatprep.subr.mxu0 0.0
    %487 = vmatpush1.msra.mxu0 %v190
    %488 = vmatprep.subr.mxu0 0.0
    %489 = vmatpush1.msra.mxu0 %v191
    %490 = vmatprep.subr.mxu0 0.0
    %491 = vmatpush1.msra.mxu0 %v192
    %492 = vmatprep.subr.mxu0 0.0
    %493 = vmatpush1.msra.mxu0 %v193
    %494 = vmatprep.subr.mxu0 0.0
    %495 = vmatpush1.msra.mxu0 %v194
    %496 = vmatprep.subr.mxu0 0.0
    %497 = vmatpush1.msra.mxu0 %v195
    %498 = vmatprep.subr.mxu0 0.0
    %499 = vmatpush1.msra.mxu0 %v196
    %500 = vmatprep.subr.mxu0 0.0
    %501 = vmatpush1.msra.mxu0 %v197
    %502 = vmatprep.subr.mxu0 0.0
    %503 = vmatpush1.msra.mxu0 %v198
    %504 = vmatprep.subr.mxu0 0.0
    %505 = vmatpush1.msra.mxu0 %v199
    %506 = vmatprep.subr.mxu0 0.0
    %507 = vmatpush1.msra.mxu0 %v200
    %508 = vmatprep.subr.mxu0 0.0
    %509 = vmatpush1.msra.mxu0 %v201
    %510 = vmatprep.mubr.f32.mxu0 %v55
    %511 = vmatmul.mubr.f32.gmra.mrb[0].mxu0 %v54
    %v512 = vpop.f32.mrb[0].mxu0
    %v513 = vadd.f32 %v408, %v512
    %v514 = vpop.f32.mrb[0].mxu0
    %515 = vmatprep.mubr.f32.mxu0 %v62
    %516 = vmatmul.mubr.f32.gmra.mrb[0].mxu0 %v61
    %v517 = vpop.f32.mrb[0].mxu0
    %v518 = vadd.f32 %v413, %v517
    %v519 = vpop.f32.mrb[0].mxu0
    %520 = vmatprep.mubr.f32.mxu0 %v69
    %521 = vmatmul.mubr.f32.gmra.mrb[0].mxu0 %v68
    %v522 = vpop.f32.mrb[0].mxu0
    %v523 = vadd.f32 %v418, %v522
    %v524 = vpop.f32.mrb[0].mxu0
    %525 = vmatprep.mubr.f32.mxu0 %v76
    %526 = vmatmul.mubr.f32.gmra.mrb[0].mxu0 %v75
    %v527 = vpop.f32.mrb[0].mxu0
    %v528 = vadd.f32 %v423, %v527
    %v529 = vpop.f32.mrb[0].mxu0
    %530 = vmatprep.mubr.f32.mxu0 %v83
    %531 = vmatmul.mubr.f32.gmra.mrb[0].mxu0 %v82
    %v532 = vpop.f32.mrb[0].mxu0
    %v533 = vadd.f32 %v428, %v532
    %v534 = vpop.f32.mrb[0].mxu0
    %535 = vmatprep.mubr.f32.mxu0 %v90
    %536 = vmatmul.mubr.f32.gmra.mrb[0].mxu0 %v89
    %v537 = vpop.f32.mrb[0].mxu0
    %v538 = vadd.f32 %v433, %v537
    %v539 = vpop.f32.mrb[0].mxu0
    %540 = vmatprep.mubr.f32.mxu0 %v97
    %541 = vmatmul.mubr.f32.gmra.mrb[0].mxu0 %v96
    %v542 = vpop.f32.mrb[0].mxu0
    %v543 = vadd.f32 %v438, %v542
    %v544 = vpop.f32.mrb[0].mxu0
    %545 = vmatprep.mubr.f32.mxu0 %v104
    %546 = vmatmul.mubr.f32.gmra.mrb[0].mxu0 %v103
    %v547 = vpop.f32.mrb[0].mxu0
    %v548 = vadd.f32 %v443, %v547
    %v549 = vpop.f32.mrb[0].mxu0
    %550 = vdwg.mxu0
    %551 = vmatprep.subr.mxu0 0.0
    %552 = vmatpush1.msra.mxu0 %v202
    %553 = vmatprep.subr.mxu0 0.0
    %554 = vmatpush1.msra.mxu0 %v203
    %555 = vmatprep.subr.mxu0 0.0
    %556 = vmatpush1.msra.mxu0 0.0
    %557 = vmatprep.subr.mxu0 0.0
    %558 = vmatpush1.msra.mxu0 0.0
    %559 = vmatprep.subr.mxu0 0.0
    %560 = vmatpush1.msra.mxu0 0.0
    %561 = vmatprep.subr.mxu0 0.0
    %562 = vmatpush1.msra.mxu0 0.0
    %563 = vmatprep.subr.mxu0 0.0
    %564 = vmatpush1.msra.mxu0 0.0
    %565 = vmatprep.subr.mxu0 0.0
    %566 = vmatpush1.msra.mxu0 0.0
    %567 = vmatprep.subr.mxu0 0.0
    %568 = vmatpush1.msra.mxu0 0.0
    %569 = vmatprep.subr.mxu0 0.0
    %570 = vmatpush1.msra.mxu0 0.0
    %571 = vmatprep.subr.mxu0 0.0
    %572 = vmatpush1.msra.mxu0 0.0
    %573 = vmatprep.subr.mxu0 0.0
    %574 = vmatpush1.msra.mxu0 0.0
    %575 = vmatprep.subr.mxu0 0.0
    %576 = vmatpush1.msra.mxu0 0.0
    %577 = vmatprep.subr.mxu0 0.0
    %578 = vmatpush1.msra.mxu0 0.0
    %579 = vmatprep.subr.mxu0 0.0
    %580 = vmatpush1.msra.mxu0 0.0
    %581 = vmatprep.subr.mxu0 0.0
    %582 = vmatpush1.msra.mxu0 0.0
    %583 = vmatprep.subr.mxu0 0.0
    %584 = vmatpush1.msra.mxu0 0.0
    %585 = vmatprep.subr.mxu0 0.0
    %586 = vmatpush1.msra.mxu0 0.0
    %587 = vmatprep.subr.mxu0 0.0
    %588 = vmatpush1.msra.mxu0 0.0
    %589 = vmatprep.subr.mxu0 0.0
    %590 = vmatpush1.msra.mxu0 0.0
    %591 = vmatprep.subr.mxu0 0.0
    %592 = vmatpush1.msra.mxu0 0.0
    %593 = vmatprep.subr.mxu0 0.0
    %594 = vmatpush1.msra.mxu0 0.0
    %595 = vmatprep.subr.mxu0 0.0
    %596 = vmatpush1.msra.mxu0 0.0
    %597 = vmatprep.subr.mxu0 0.0
    %598 = vmatpush1.msra.mxu0 0.0
    %599 = vmatprep.subr.mxu0 0.0
    %600 = vmatpush1.msra.mxu0 0.0
    %601 = vmatprep.subr.mxu0 0.0
    %602 = vmatpush1.msra.mxu0 0.0
    %603 = vmatprep.subr.mxu0 0.0
    %604 = vmatpush1.msra.mxu0 0.0
    %605 = vmatprep.subr.mxu0 0.0
    %606 = vmatpush1.msra.mxu0 0.0
    %607 = vmatprep.subr.mxu0 0.0
    %608 = vmatpush1.msra.mxu0 0.0
    %609 = vmatprep.subr.mxu0 0.0
    %610 = vmatpush1.msra.mxu0 0.0
    %611 = vmatprep.subr.mxu0 0.0
    %612 = vmatpush1.msra.mxu0 0.0
    %613 = vmatprep.subr.mxu0 0.0
    %614 = vmatpush1.msra.mxu0 0.0
    %615 = vmatprep.mubr.f32.mxu0 0.0
    %616 = vmatmul.mubr.f32.gmra.mrb[0].mxu0 %v213
    %v617 = vpop.f32.mrb[0].mxu0
    %v618 = vadd.f32 %v513, %v617
    %v619 = vpop.f32.mrb[0].mxu0
    %620 = vmatprep.mubr.f32.mxu0 0.0
    %621 = vmatmul.mubr.f32.gmra.mrb[0].mxu0 %v216
    %v622 = vpop.f32.mrb[0].mxu0
    %v623 = vadd.f32 %v518, %v622
    %v624 = vpop.f32.mrb[0].mxu0
    %625 = vmatprep.mubr.f32.mxu0 0.0
    %626 = vmatmul.mubr.f32.gmra.mrb[0].mxu0 %v219
    %v627 = vpop.f32.mrb[0].mxu0
    %v628 = vadd.f32 %v523, %v627
    %v629 = vpop.f32.mrb[0].mxu0
    %630 = vmatprep.mubr.f32.mxu0 0.0
    %631 = vmatmul.mubr.f32.gmra.mrb[0].mxu0 %v222
    %v632 = vpop.f32.mrb[0].mxu0
    %v633 = vadd.f32 %v528, %v632
    %v634 = vpop.f32.mrb[0].mxu0
    %635 = vmatprep.mubr.f32.mxu0 0.0
    %636 = vmatmul.mubr.f32.gmra.mrb[0].mxu0 %v225
    %v637 = vpop.f32.mrb[0].mxu0
    %v638 = vadd.f32 %v533, %v637
    %v639 = vpop.f32.mrb[0].mxu0
    %640 = vmatprep.mubr.f32.mxu0 0.0
    %641 = vmatmul.mubr.f32.gmra.mrb[0].mxu0 %v228
    %v642 = vpop.f32.mrb[0].mxu0
    %v643 = vadd.f32 %v538, %v642
    %v644 = vpop.f32.mrb[0].mxu0
    %645 = vmatprep.mubr.f32.mxu0 0.0
    %646 = vmatmul.mubr.f32.gmra.mrb[0].mxu0 %v231
    %v647 = vpop.f32.mrb[0].mxu0
    %v648 = vadd.f32 %v543, %v647
    %v649 = vpop.f32.mrb[0].mxu0
    %650 = vmatprep.mubr.f32.mxu0 0.0
    %651 = vmatmul.mubr.f32.gmra.mrb[0].mxu0 %v234
    %v652 = vpop.f32.mrb[0].mxu0
    %v653 = vadd.f32 %v548, %v652
    %v654 = vpop.f32.mrb[0].mxu0
    %655 = vdwg.mxu0
    %vm656 = vcmp.gt.f32.partialorder %v618, 0.0
    %vm657 = vcmp.gt.f32.partialorder %v623, 0.0
    %vm658 = vcmp.gt.f32.partialorder %v628, 0.0
    %vm659 = vcmp.gt.f32.partialorder %v633, 0.0
    %vm660 = vcmp.gt.f32.partialorder %v638, 0.0
    %vm661 = vcmp.gt.f32.partialorder %v643, 0.0
    %vm662 = vcmp.gt.f32.partialorder %v648, 0.0
    %vm663 = vcmp.gt.f32.partialorder %v653, 0.0
    %v664 = vmul.f32 %v618, 0.1
    %v665 = vmul.f32 %v623, 0.1
    %v666 = vmul.f32 %v628, 0.1
    %v667 = vmul.f32 %v633, 0.1
    %v668 = vmul.f32 %v638, 0.1
    %v669 = vmul.f32 %v643, 0.1
    %v670 = vmul.f32 %v648, 0.1
    %v671 = vmul.f32 %v653, 0.1
    %v672 = vsel %vm656, %v618, %v664
    %v673 = vsel %vm657, %v623, %v665
    %v674 = vsel %vm658, %v628, %v666
    %v675 = vsel %vm659, %v633, %v667
    %v676 = vsel %vm660, %v638, %v668
    %v677 = vsel %vm661, %v643, %v669
    %v678 = vsel %vm662, %v648, %v670
    %v679 = vsel %vm663, %v653, %v671
    %v680 = vld [vmem:[%s3] sm:$0x1]
    %v682 = vlaneseq
    %v683 = vshrl.u32 %v682, 7
    %v684 = vsub.s32 0, %v683
    %v685 = vrot.slane %v680, %v684
    %v687 = vmul.f32 %v672, %v685
    %v688 = vmul.f32 %v673, %v685
    %v689 = vmul.f32 %v674, %v685
    %v690 = vmul.f32 %v675, %v685
    %v691 = vmul.f32 %v676, %v685
    %v692 = vmul.f32 %v677, %v685
    %v693 = vmul.f32 %v678, %v685
    %v694 = vmul.f32 %v679, %v685
    %695 = vadd.xlane.f32.xlu0 %v687
    %v696 = vpop.xlane.xlu0 %695
    %697 = vadd.xlane.f32.xlu0 %v688
    %v698 = vpop.xlane.xlu0 %697
    %699 = vadd.xlane.f32.xlu0 %v689
    %v700 = vpop.xlane.xlu0 %699
    %701 = vadd.xlane.f32.xlu0 %v690
    %v702 = vpop.xlane.xlu0 %701
    %703 = vadd.xlane.f32.xlu0 %v691
    %v704 = vpop.xlane.xlu0 %703
    %705 = vadd.xlane.f32.xlu0 %v692
    %v706 = vpop.xlane.xlu0 %705
    %707 = vadd.xlane.f32.xlu0 %v693
    %v708 = vpop.xlane.xlu0 %707
    %709 = vadd.xlane.f32.xlu0 %v694
    %v710 = vpop.xlane.xlu0 %709
    %v711 = vld [vmem:[#allocation2] sm:$0x1]
    %v713 = vlaneseq
    %v714 = vshrl.u32 %v713, 7
    %v715 = vsub.s32 0, %v714
    %v716 = vrot.slane %v711, %v715
    %v718 = vadd.f32 %v696, %v716
    %v719 = vadd.f32 %v698, %v716
    %v720 = vadd.f32 %v700, %v716
    %v721 = vadd.f32 %v702, %v716
    %v722 = vadd.f32 %v704, %v716
    %v723 = vadd.f32 %v706, %v716
    %v724 = vadd.f32 %v708, %v716
    %v725 = vadd.f32 %v710, %v716
    %v726 = vand.u32 2147483647, %v718
    %v727 = vand.u32 2147483647, %v719
    %v728 = vand.u32 2147483647, %v720
    %v729 = vand.u32 2147483647, %v721
    %v730 = vand.u32 2147483647, %v722
    %v731 = vand.u32 2147483647, %v723
    %v732 = vand.u32 2147483647, %v724
    %v733 = vand.u32 2147483647, %v725
    %v734 = vsub.f32 0.0, %v726
    %v735 = vsub.f32 0.0, %v727
    %v736 = vsub.f32 0.0, %v728
    %v737 = vsub.f32 0.0, %v729
    %v738 = vsub.f32 0.0, %v730
    %v739 = vsub.f32 0.0, %v731
    %v740 = vsub.f32 0.0, %v732
    %v741 = vsub.f32 0.0, %v733
    %v742 = vmul.f32 %v734, 1.442695
    %v743 = vpow.pop %v742
    %v744 = vmul.f32 %v735, 1.442695
    %v745 = vpow.pop %v744
    %v746 = vmul.f32 %v736, 1.442695
    %v747 = vpow.pop %v746
    %v748 = vmul.f32 %v737, 1.442695
    %v749 = vpow.pop %v748
    %v750 = vmul.f32 %v738, 1.442695
    %v751 = vpow.pop %v750
    %v752 = vmul.f32 %v739, 1.442695
    %v753 = vpow.pop %v752
    %v754 = vmul.f32 %v740, 1.442695
    %v755 = vpow.pop %v754
    %v756 = vmul.f32 %v741, 1.442695
    %v757 = vpow.pop %v756
    %v758 = vadd.f32 %v743, 1.0
    %v759 = vadd.f32 %v745, 1.0
    %v760 = vadd.f32 %v747, 1.0
    %v761 = vadd.f32 %v749, 1.0
    %v762 = vadd.f32 %v751, 1.0
    %v763 = vadd.f32 %v753, 1.0
    %v764 = vadd.f32 %v755, 1.0
    %v765 = vadd.f32 %v757, 1.0
    %v766 = vrcp.pop %v758
    %v767 = vrcp.pop %v759
    %v768 = vrcp.pop %v760
    %v769 = vrcp.pop %v761
    %v770 = vrcp.pop %v762
    %v771 = vrcp.pop %v763
    %v772 = vrcp.pop %v764
    %v773 = vrcp.pop %v765
    %vm774 = vcmp.ge.f32.partialorder %v718, 0.0
    %vm775 = vcmp.ge.f32.partialorder %v719, 0.0
    %vm776 = vcmp.ge.f32.partialorder %v720, 0.0
    %vm777 = vcmp.ge.f32.partialorder %v721, 0.0
    %vm778 = vcmp.ge.f32.partialorder %v722, 0.0
    %vm779 = vcmp.ge.f32.partialorder %v723, 0.0
    %vm780 = vcmp.ge.f32.partialorder %v724, 0.0
    %vm781 = vcmp.ge.f32.partialorder %v725, 0.0
    %v782 = vmul.f32 %v743, %v766
    %v783 = vmul.f32 %v745, %v767
    %v784 = vmul.f32 %v747, %v768
    %v785 = vmul.f32 %v749, %v769
    %v786 = vmul.f32 %v751, %v770
    %v787 = vmul.f32 %v753, %v771
    %v788 = vmul.f32 %v755, %v772
    %v789 = vmul.f32 %v757, %v773
    %v790 = vsel %vm774, %v766, %v782
    %v791 = vsel %vm775, %v767, %v783
    %v792 = vsel %vm776, %v768, %v784
    %v793 = vsel %vm777, %v769, %v785
    %v794 = vsel %vm778, %v770, %v786
    %v795 = vsel %vm779, %v771, %v787
    %v796 = vsel %vm780, %v772, %v788
    %v797 = vsel %vm781, %v773, %v789
    %vm798 = vcmask 7168
    %799 = vst.msk [vmem:[%s5] sm:$0xff] %vm798, %v790
    %800 = vst.msk [vmem:[%s5 + $0x8] sm:$0xff] %vm798, %v791
    %801 = vst.msk [vmem:[%s5 + $0x10] sm:$0xff] %vm798, %v792
    %802 = vst.msk [vmem:[%s5 + $0x18] sm:$0xff] %vm798, %v793
    %803 = vst.msk [vmem:[%s5 + $0x20] sm:$0xff] %vm798, %v794
    %804 = vst.msk [vmem:[%s5 + $0x28] sm:$0xff] %vm798, %v795
    %805 = vst.msk [vmem:[%s5 + $0x30] sm:$0xff] %vm798, %v796
    %806 = vst.msk [vmem:[%s5 + $0x38] sm:$0xff] %vm798, %v797
    // Predicated region
    $region30: #{tpu_custom_call.1} parent=1 // pred_check
      _
    $region31: #{tpu_custom_call.1} parent=1 // pred_check_branch
      %808 = sbr.rel (0) target = $region33
    $region32: #{tpu_custom_call.1} parent=1 // pred_region
      _
    $region33: #{tpu_custom_call.1} parent=1 // pred_fallthru
      _
    // Predicated region
    $region34: #{tpu_custom_call.1} parent=1 // pred_check
      _
    $region35: #{tpu_custom_call.1} parent=1 // pred_check_branch
      %810 = sbr.rel (0) target = $region37
    $region36: #{tpu_custom_call.1} parent=1 // pred_region
      _
    $region37: #{tpu_custom_call.1} parent=1 // pred_fallthru
      _
    %811 = vsyncpa [#allocation4], 1
    %812 = vsyncpa [#allocation6], 1

</llo_original>
